<compile_context>
chip_gen: v7x
topology: tpu7x:2x2x1
jax: 0.10.0
libtpu: 0.0.40
codegen_flags: <defaults>
</compile_context>

<pallas_src>
from functools import partial

import jax
import jax.numpy as jnp
from jax import lax
from jax.experimental import pallas as pl
from jax.experimental.pallas import tpu as pltpu


# --------------------------- VMEM budget (per gen) ---------------------------

def _default_vmem_limit():
    # v5e/v6e: 128 MiB physical VMEM -> 64 MiB scoped budget.
    # v7x: only 64 MiB per TensorCore -> cap at 40 MiB (perf review).
    try:
        cap = getattr(pltpu.get_tpu_info(), "vmem_capacity_bytes", None)
        if cap is not None and cap >= 96 * 1024 * 1024:
            return 64 * 1024 * 1024
        return 40 * 1024 * 1024
    except Exception:
        return 32 * 1024 * 1024


_VMEM_LIMIT = _default_vmem_limit()


# ----------------------------- Pallas kernels ------------------------------

def _sr_conv_kernel(x_ref, w_ref, b_ref, o_ref, *, sr):
    """One output-image row of the stride-sr / kernel-sr Conv2d.

    x_ref: (1, sr, Ws, sr*C) f32  -- one input image row-strip, channels-last.
           x_ref[0, dh] is a (Ws, sr*C) view whose columns are (dw, cin).
    w_ref: (sr, sr*C, C)     bf16 -- per-kernel-row tap weights.
    b_ref: (1, C)            f32
    o_ref: (1, Ws, C)        bf16 -- conv output for this image row.
    """
    acc = jnp.zeros(o_ref.shape[1:], jnp.float32) + b_ref[...]
    for dh in range(sr):  # static unrolled tap loop; no lane slicing anywhere
        acc = acc + jnp.dot(x_ref[0, dh].astype(jnp.bfloat16), w_ref[dh],
                            preferred_element_type=jnp.float32)
    o_ref[0] = acc.astype(o_ref.dtype)


def _fused_attn_kernel(*refs, num_heads, do_norm, share_kv, with_attn):
    """Per-batch-element fused attention.

    refs (share_kv=False):
      x   (1, N,  C) f32       query-source tokens
      xk  (1, Nk, C) f32|bf16  key/value-source tokens (pre-norm if do_norm)
      qw  (H, C, hd) bf16      per-head q weight, scale folded in
      kw  (H, C, hd) bf16      per-head k weight
      vw  (H, C, hd) bf16      per-head v weight
      pw  (H, hd, C) bf16      per-head proj weight
      pb  (1, C)     f32       proj bias
      ng / nb (1, C) f32       LayerNorm gamma / beta (used iff do_norm)
      outputs: out (1, N, C) f32 [, attn (1, H, N, Nk) bf16]
    When share_kv=True the xk ref is omitted and x is reused for kv.
    """
    if share_kv:
        x_ref, qw_ref, kw_ref, vw_ref, pw_ref, pb_ref, ng_ref, nb_ref = refs[:8]
        out_refs = refs[8:]
        xk_ref = x_ref
    else:
        (x_ref, xk_ref, qw_ref, kw_ref, vw_ref, pw_ref,
         pb_ref, ng_ref, nb_ref) = refs[:9]
        out_refs = refs[9:]
    out_ref = out_refs[0]
    attn_ref = out_refs[1] if with_attn else None

    xq_b = x_ref[0].astype(jnp.bfloat16)                 # (N, C)
    xk_raw = xk_ref[0]                                   # (Nk, C)
    if do_norm:                                          # LayerNorm in f32
        xk = xk_raw.astype(jnp.float32)
        mean = jnp.mean(xk, axis=-1, keepdims=True)
        var = jnp.mean(jnp.square(xk - mean), axis=-1, keepdims=True)
        xk = (xk - mean) * lax.rsqrt(var + 1e-5) * ng_ref[...] + nb_ref[...]
        xk_b = xk.astype(jnp.bfloat16)
    else:
        xk_b = xk_raw.astype(jnp.bfloat16)

    N = xq_b.shape[0]
    C = out_ref.shape[-1]
    out_acc = jnp.zeros((N, C), jnp.float32)
    for h in range(num_heads):                           # static unrolled loop
        # Per-head projections directly from whole activations (no lane slice);
        # the head split lives in the pre-split weights.  Scale already folded.
        qh = jnp.dot(xq_b, qw_ref[h], preferred_element_type=jnp.float32)
        kh = jnp.dot(xk_b, kw_ref[h], preferred_element_type=jnp.float32)
        vh = jnp.dot(xk_b, vw_ref[h], preferred_element_type=jnp.float32)
        # s = q @ k^T without materialising a transpose.
        s = lax.dot_general(qh.astype(jnp.bfloat16), kh.astype(jnp.bfloat16),
                            (((1,), (1,)), ((), ())),
                            preferred_element_type=jnp.float32)   # (N, Nk)
        m = jnp.max(s, axis=-1, keepdims=True)
        e = jnp.exp(s - m)
        p = e * pl.reciprocal(jnp.sum(e, axis=-1, keepdims=True), approx=True)
        if with_attn:
            attn_ref[0, h] = p.astype(attn_ref.dtype)             # bf16 store
        ctx_h = jnp.dot(p.astype(jnp.bfloat16), vh.astype(jnp.bfloat16),
                        preferred_element_type=jnp.float32)       # (N, hd)
        # Accumulate the output projection per head -> no ctx concat.
        out_acc = out_acc + jnp.dot(ctx_h.astype(jnp.bfloat16), pw_ref[h],
                                    preferred_element_type=jnp.float32)

    out_ref[0] = out_acc + pb_ref[...]


# ----------------------------- Pallas wrappers ------------------------------

def pallas_sr_conv(x_sp, w_taps, bias, *, sr, H, W):
    """Stride-sr / kernel-sr Conv2d on channels-last tokens.

    x_sp: (B, H*W, C) f32 (row-major tokens) -> returns (B, Hs*Ws, C) bf16.
    No im2col materialisation: the token layout is only re-viewed (free
    reshape) and the tap accumulation happens in VMEM.
    """
    B, HW, C = x_sp.shape
    Hs, Ws = H // sr, W // sr
    x4 = x_sp.reshape(B * Hs, sr, Ws, sr * C)            # free row-major view
    y = pl.pallas_call(
        partial(_sr_conv_kernel, sr=sr),
        out_shape=jax.ShapeDtypeStruct((B * Hs, Ws, C), jnp.bfloat16),
        grid=(B * Hs,),
        in_specs=[pl.BlockSpec((1, sr, Ws, sr * C), lambda i: (i, 0, 0, 0)),
                  pl.BlockSpec((sr, sr * C, C), lambda i: (0, 0, 0)),
                  pl.BlockSpec((1, C), lambda i: (0, 0))],
        out_specs=pl.BlockSpec((1, Ws, C), lambda i: (i, 0, 0)),
        compiler_params=pltpu.CompilerParams(
            dimension_semantics=("parallel",),
            vmem_limit_bytes=_VMEM_LIMIT),
    )(x4, w_taps, bias)
    return y.reshape(B, Hs * Ws, C)


def pallas_fused_attention(x, x_kv, pt, *, num_heads, do_norm, share_kv,
                           return_attn=True):
    """x: (B, N, C) f32, x_kv: (B, Nk, C) f32/bf16 (or None when share_kv)."""
    B, N, C = x.shape
    hd = C // num_heads
    Nk = N if share_kv else x_kv.shape[1]

    kern = partial(_fused_attn_kernel, num_heads=num_heads, do_norm=do_norm,
                   share_kv=share_kv, with_attn=return_attn)

    in_specs = [pl.BlockSpec((1, N, C), lambda b: (b, 0, 0))]
    inputs = [x]
    if not share_kv:
        in_specs.append(pl.BlockSpec((1, Nk, C), lambda b: (b, 0, 0)))
        inputs.append(x_kv)
    in_specs += [
        pl.BlockSpec((num_heads, C, hd), lambda b: (0, 0, 0)),   # q heads
        pl.BlockSpec((num_heads, C, hd), lambda b: (0, 0, 0)),   # k heads
        pl.BlockSpec((num_heads, C, hd), lambda b: (0, 0, 0)),   # v heads
        pl.BlockSpec((num_heads, hd, C), lambda b: (0, 0, 0)),   # proj heads
        pl.BlockSpec((1, C), lambda b: (0, 0)),                  # proj bias
        pl.BlockSpec((1, C), lambda b: (0, 0)),                  # LN gamma
        pl.BlockSpec((1, C), lambda b: (0, 0)),                  # LN beta
    ]
    inputs += [pt["qw_h"], pt["kw_h"], pt["vw_h"], pt["pw_h"],
               pt["proj_b"], pt["norm_g"], pt["norm_b"]]

    out_shapes = [jax.ShapeDtypeStruct((B, N, C), jnp.float32)]
    out_specs = [pl.BlockSpec((1, N, C), lambda b: (b, 0, 0))]
    if return_attn:
        out_shapes.append(jax.ShapeDtypeStruct((B, num_heads, N, Nk),
                                               jnp.bfloat16))
        out_specs.append(pl.BlockSpec((1, num_heads, N, Nk),
                                      lambda b: (b, 0, 0, 0)))

    outs = pl.pallas_call(
        kern,
        out_shape=tuple(out_shapes),
        grid=(B,),
        in_specs=in_specs,
        out_specs=tuple(out_specs),
        compiler_params=pltpu.CompilerParams(
            dimension_semantics=("parallel",),
            vmem_limit_bytes=_VMEM_LIMIT),
    )(*inputs)

    if return_attn:
        return outs[0], outs[1]
    return outs[0], None


# ------------------------- parameter preparation -----------------------------

def prepare_params(params, num_heads, sr_ratio):
    """One-time: transpose, split per head, fold the softmax scale, cast bf16."""
    C = params["q_w"].shape[0]
    hd = C // num_heads
    scale = hd ** (-0.5)

    q_w_t = params["q_w"].T * scale                      # scale folded into q
    kv_w_t = params["kv_w"].T                            # (C, 2C): [k | v]
    pt = {
        "qw_h": q_w_t.reshape(C, num_heads, hd).transpose(1, 0, 2)
                     .astype(jnp.bfloat16),
        "kw_h": kv_w_t[:, :C].reshape(C, num_heads, hd).transpose(1, 0, 2)
                     .astype(jnp.bfloat16),
        "vw_h": kv_w_t[:, C:].reshape(C, num_heads, hd).transpose(1, 0, 2)
                     .astype(jnp.bfloat16),
        "pw_h": params["proj_w"].T.reshape(num_heads, hd, C)
                     .astype(jnp.bfloat16),
        "proj_b": params["proj_b"].reshape(1, C).astype(jnp.float32),
    }
    if sr_ratio > 1:
        # OIHW (C, C, sr, sr) -> (kh, kw, Cin, Cout) -> (kh, kw*Cin, Cout):
        # per-kernel-row taps matching the (Ws, sr*C) channels-last row view.
        pt["sr_w_taps"] = (jnp.transpose(params["sr_w"], (2, 3, 1, 0))
                           .reshape(sr_ratio, sr_ratio * C, C)
                           .astype(jnp.bfloat16))
        pt["sr_b"] = params["sr_b"].reshape(1, C).astype(jnp.float32)
        pt["norm_g"] = params["norm_g"].reshape(1, C).astype(jnp.float32)
        pt["norm_b"] = params["norm_b"].reshape(1, C).astype(jnp.float32)
    else:
        pt["norm_g"] = jnp.ones((1, C), jnp.float32)
        pt["norm_b"] = jnp.zeros((1, C), jnp.float32)
    return pt


# ------------------------------ forward pass --------------------------------

def attention_forward(x, H, W, pt, *, num_heads, sr_ratio=1, locals_=0,
                      return_attn=True):
    """Mirrors Attention.forward(x, H, W).  x: (B, N, C) float32."""
    B, N, C = x.shape

    if sr_ratio > 1:
        x_sp = x[:, 1:, :] if locals_ else x             # spatial tokens only
        x_ = pallas_sr_conv(x_sp, pt["sr_w_taps"], pt["sr_b"],
                            sr=sr_ratio, H=H, W=W)       # (B, Hs*Ws, C) bf16
        if locals_:
            x_ = jnp.concatenate([x[:, :1, :].astype(jnp.bfloat16), x_], axis=1)
        return pallas_fused_attention(x, x_, pt, num_heads=num_heads,
                                      do_norm=True, share_kv=False,
                                      return_attn=return_attn)
    # sr == 1: kv source is x itself -> DMA it once, reuse in-kernel.
    return pallas_fused_attention(x, None, pt, num_heads=num_heads,
                                  do_norm=False, share_kv=True,
                                  return_attn=return_attn)


# ------------------------- pure-JAX reference check --------------------------

def attention_reference(x, H, W, params, *, num_heads, sr_ratio=1, locals_=0):
    B, N, C = x.shape
    hd = C // num_heads
    scale = hd ** (-0.5)
    q = (x @ params["q_w"].T).reshape(B, N, num_heads, hd).transpose(0, 2, 1, 3)
    if sr_ratio > 1:
        x_sp = x[:, 1:, :] if locals_ else x
        x_nchw = x_sp.transpose(0, 2, 1).reshape(B, C, H, W)
        y = lax.conv_general_dilated(
            x_nchw, params["sr_w"], window_strides=(sr_ratio, sr_ratio),
            padding="VALID", dimension_numbers=("NCHW", "OIHW", "NCHW"))
        y = y + params["sr_b"].reshape(1, C, 1, 1)
        x_ = y.reshape(B, C, -1).transpose(0, 2, 1)
        if locals_:
            x_ = jnp.concatenate([x[:, :1, :], x_], axis=1)
        mean = x_.mean(-1, keepdims=True)
        var = ((x_ - mean) ** 2).mean(-1, keepdims=True)
        x_ = (x_ - mean) / jnp.sqrt(var + 1e-5) * params["norm_g"] + params["norm_b"]
    else:
        x_ = x
    kv = (x_ @ params["kv_w"].T).reshape(B, -1, 2, num_heads, hd).transpose(2, 0, 3, 1, 4)
    k, v = kv[0], kv[1]
    s = jnp.einsum("bhqd,bhkd->bhqk", q, k) * scale
    attn = jax.nn.softmax(s, axis=-1)
    ctx = jnp.einsum("bhqk,bhkd->bhqd", attn, v).transpose(0, 2, 1, 3).reshape(B, N, C)
    out = ctx @ params["proj_w"].T + params["proj_b"]
    return out, attn


# ---------------------------------- main -------------------------------------

def _make_params(key, C, sr_ratio):
    ks = jax.random.split(key, 6)
    return {
        "q_w": 0.05 * jax.random.normal(ks[0], (C, C), jnp.float32),
        "kv_w": 0.05 * jax.random.normal(ks[1], (2 * C, C), jnp.float32),
        "proj_w": 0.05 * jax.random.normal(ks[2], (C, C), jnp.float32),
        "proj_b": 0.01 * jax.random.normal(ks[3], (C,), jnp.float32),
        "sr_w": 0.05 * jax.random.normal(ks[4], (C, C, sr_ratio, sr_ratio), jnp.float32),
        "sr_b": 0.01 * jax.random.normal(ks[5], (C,), jnp.float32),
        "norm_g": jnp.ones((C,), jnp.float32),
        "norm_b": jnp.zeros((C,), jnp.float32),
    }


def _run_case(base_key, case_id, B, H, W, C, num_heads, sr_ratio, locals_):
    key = jax.random.fold_in(base_key, case_id)
    kp, kx = jax.random.split(key)
    N = H * W + (1 if locals_ else 0)
    params = _make_params(kp, C, max(sr_ratio, 1))
    x = jax.random.normal(kx, (B, N, C), jnp.float32)
    pt = prepare_params(params, num_heads, sr_ratio)

    out, attn = attention_forward(x, H, W, pt, num_heads=num_heads,
                                  sr_ratio=sr_ratio, locals_=locals_)
    out = jax.block_until_ready(out)
    attn = jax.block_until_ready(attn)

    ref_out, ref_attn = attention_reference(x, H, W, params, num_heads=num_heads,
                                            sr_ratio=sr_ratio, locals_=locals_)
    if sr_ratio > 1:
        Nk = (H // sr_ratio) * (W // sr_ratio) + (1 if locals_ else 0)
    else:
        Nk = N
    assert out.shape == (B, N, C)
    assert attn.shape == (B, num_heads, N, Nk)
    attn32 = attn.astype(jnp.float32)
    assert jnp.allclose(out, ref_out, atol=2e-2, rtol=2e-2), \
        float(jnp.max(jnp.abs(out - ref_out)))
    assert jnp.allclose(attn32, ref_attn, atol=2e-2, rtol=2e-2), \
        float(jnp.max(jnp.abs(attn32 - ref_attn)))

    # Also exercise the (cheaper) no-attn-prob path.
    out2, _ = attention_forward(x, H, W, pt, num_heads=num_heads,
                                sr_ratio=sr_ratio, locals_=locals_,
                                return_attn=False)
    out2 = jax.block_until_ready(out2)
    assert jnp.allclose(out2, ref_out, atol=2e-2, rtol=2e-2)


if __name__ == "__main__":
    base_key = jax.random.PRNGKey(0)
    # Small configs consistent with the module (dim=32, heads=4).
    _run_case(base_key, 0, B=2, H=8, W=8, C=32, num_heads=4, sr_ratio=2, locals_=0)
    _run_case(base_key, 1, B=2, H=8, W=8, C=32, num_heads=4, sr_ratio=1, locals_=0)
    _run_case(base_key, 2, B=2, H=8, W=8, C=32, num_heads=4, sr_ratio=2, locals_=1)
    print("KERNEL_OK")
</pallas_src>

<mosaic_0001>
module attributes {stable_mosaic.version = 11 : i64} {
  func.func @_sr_conv_kernel(%arg0: i32, %arg1: memref<1x2x4x64xf32, #tpu.memory_space<vmem>>, %arg2: memref<2x64x32xbf16, #tpu.memory_space<vmem>>, %arg3: memref<1x32xf32, #tpu.memory_space<vmem>>, %arg4: memref<1x4x32xbf16, #tpu.memory_space<vmem>>) attributes {dimension_semantics = [#tpu.dimension_semantics<parallel>], iteration_bounds = array<i64: 8>, scalar_prefetch = 0 : i64, scratch_operands = 0 : i64, tpu.core_type = #tpu.core_type<tc>, window_params = [{transform_indices = @transform_0, window_bounds = array<i64: 1, 2, 4, 64>}, {pipeline_mode = #tpu.pipeline_mode<synchronous>, transform_indices = @transform_1, window_bounds = array<i64: 2, 64, 32>}, {pipeline_mode = #tpu.pipeline_mode<synchronous>, transform_indices = @transform_2, window_bounds = array<i64: 1, 32>}, {transform_indices = @transform_3, window_bounds = array<i64: 1, 4, 32>}]} {
    %cst = arith.constant 0.000000e+00 : f32
    %0 = vector.broadcast %cst : f32 to vector<4x32xf32>
    %c0 = arith.constant 0 : index
    %c0_0 = arith.constant 0 : index
    %1 = vector.load %arg3[%c0, %c0_0] : memref<1x32xf32, #tpu.memory_space<vmem>>, vector<1x32xf32>
    %2 = vector.broadcast %1 : vector<1x32xf32> to vector<4x32xf32>
    %3 = arith.addf %0, %2 : vector<4x32xf32>
    %c0_1 = arith.constant 0 : index
    %c0_2 = arith.constant 0 : index
    %c0_3 = arith.constant 0 : index
    %c0_4 = arith.constant 0 : index
    %4 = vector.load %arg1[%c0_1, %c0_2, %c0_3, %c0_4] : memref<1x2x4x64xf32, #tpu.memory_space<vmem>>, vector<1x1x4x64xf32>
    %5 = vector.shape_cast %4 : vector<1x1x4x64xf32> to vector<4x64xf32>
    %6 = arith.truncf %5 : vector<4x64xf32> to vector<4x64xbf16>
    %c0_5 = arith.constant 0 : index
    %c0_6 = arith.constant 0 : index
    %c0_7 = arith.constant 0 : index
    %7 = vector.load %arg2[%c0_5, %c0_6, %c0_7] : memref<2x64x32xbf16, #tpu.memory_space<vmem>>, vector<1x64x32xbf16>
    %8 = vector.shape_cast %7 : vector<1x64x32xbf16> to vector<64x32xbf16>
    %cst_8 = arith.constant dense<0.000000e+00> : vector<4x32xf32>
    %9 = tpu.matmul %6, %8, %cst_8 {dimension_numbers = #tpu.dot_dimension_numbers<[1], [0], [0], [1], [0, 0, 1, 1], [], []>} : vector<4x64xbf16>, vector<64x32xbf16>, vector<4x32xf32> -> vector<4x32xf32>
    %10 = arith.addf %3, %9 : vector<4x32xf32>
    %c0_9 = arith.constant 0 : index
    %c1 = arith.constant 1 : index
    %c0_10 = arith.constant 0 : index
    %c0_11 = arith.constant 0 : index
    %11 = vector.load %arg1[%c0_9, %c1, %c0_10, %c0_11] : memref<1x2x4x64xf32, #tpu.memory_space<vmem>>, vector<1x1x4x64xf32>
    %12 = vector.shape_cast %11 : vector<1x1x4x64xf32> to vector<4x64xf32>
    %13 = arith.truncf %12 : vector<4x64xf32> to vector<4x64xbf16>
    %c1_12 = arith.constant 1 : index
    %c0_13 = arith.constant 0 : index
    %c0_14 = arith.constant 0 : index
    %14 = vector.load %arg2[%c1_12, %c0_13, %c0_14] : memref<2x64x32xbf16, #tpu.memory_space<vmem>>, vector<1x64x32xbf16>
    %15 = vector.shape_cast %14 : vector<1x64x32xbf16> to vector<64x32xbf16>
    %cst_15 = arith.constant dense<0.000000e+00> : vector<4x32xf32>
    %16 = tpu.matmul %13, %15, %cst_15 {dimension_numbers = #tpu.dot_dimension_numbers<[1], [0], [0], [1], [0, 0, 1, 1], [], []>} : vector<4x64xbf16>, vector<64x32xbf16>, vector<4x32xf32> -> vector<4x32xf32>
    %17 = arith.addf %10, %16 : vector<4x32xf32>
    %18 = arith.truncf %17 : vector<4x32xf32> to vector<4x32xbf16>
    %c0_16 = arith.constant 0 : index
    %c0_17 = arith.constant 0 : index
    %c0_18 = arith.constant 0 : index
    %19 = vector.load %arg4[%c0_16, %c0_17, %c0_18] : memref<1x4x32xbf16, #tpu.memory_space<vmem>>, vector<1x4x32xbf16>
    %20 = vector.shape_cast %19 : vector<1x4x32xbf16> to vector<4x32xbf16>
    %21 = vector.shape_cast %18 : vector<4x32xbf16> to vector<1x4x32xbf16>
    tpu.vector_store %arg4[%c0_16, %c0_17, %c0_18], %21 {strides = array<i32>} : memref<1x4x32xbf16, #tpu.memory_space<vmem>>, vector<1x4x32xbf16>,
    return
  }
  func.func @transform_0(%arg0: i32) -> (i32, i32, i32, i32) {
    %c0_i32 = arith.constant 0 : i32
    %c0_i32_0 = arith.constant 0 : i32
    %c0_i32_1 = arith.constant 0 : i32
    %c0_i32_2 = arith.constant 0 : i32
    return %arg0, %c0_i32, %c0_i32_0, %c0_i32_1 : i32, i32, i32, i32
  }
  func.func @transform_1(%arg0: i32) -> (i32, i32, i32) {
    %c0_i32 = arith.constant 0 : i32
    %c0_i32_0 = arith.constant 0 : i32
    %c0_i32_1 = arith.constant 0 : i32
    %c0_i32_2 = arith.constant 0 : i32
    return %c0_i32, %c0_i32_0, %c0_i32_1 : i32, i32, i32
  }
  func.func @transform_2(%arg0: i32) -> (i32, i32) {
    %c0_i32 = arith.constant 0 : i32
    %c0_i32_0 = arith.constant 0 : i32
    %c0_i32_1 = arith.constant 0 : i32
    return %c0_i32, %c0_i32_0 : i32, i32
  }
  func.func @transform_3(%arg0: i32) -> (i32, i32, i32) {
    %c0_i32 = arith.constant 0 : i32
    %c0_i32_0 = arith.constant 0 : i32
    %c0_i32_1 = arith.constant 0 : i32
    return %arg0, %c0_i32, %c0_i32_0 : i32, i32, i32
  }
}

</mosaic_0001>

<llo_original>
// kernel: tpu_custom_call.1
$region0: #{tpu_custom_call.1}
  #allocation0 [shape = 'u32[]', space=smem, size = 0x4, offset = 0x4, fixed_abs, tag = 'smem constant byte address 0x4 - core index']
  #allocation1 [shape = 'u32[144,128]{1,0:T(1,128)}', space=vmem, size = 0x12000, scoped, tag = 'internal scratch']
  %s0 = inlined_call_operand.vmem [shape: f32[8,2,4,64], index: 0, kind: input, shape index: {}]
  %s1 = inlined_call_operand.vmem [shape: bf16[2,64,32], index: 1, kind: input, shape index: {}]
  %s2 = inlined_call_operand.vmem [shape: f32[1,32], index: 2, kind: input, shape index: {}]
  %s3 = inlined_call_operand.hbm [shape: bf16[8,4,32], index: 3, kind: output, shape index: {}]
  %s4 = sld [smem:[#allocation0]]
  $region45: #{tpu_custom_call.1} parent=0
    _
  %s6 = ssub.s32 1, %s4
  %s7 = scalar_select 0, %s6, %s4
  $region1: #{tpu_custom_call.1} parent=0
    #allocation2 [shape = 'u8[2048]{0}', space=vmem, size = 0x800, scoped, tag = 'output window, operand 0']
    #allocation3 [shape = 's32[2]{0}', space=sflag, size = 0x8, scoped, tag = 'scoped memory for tpu_custom_call.1']
    %8 = vsyncpa [#allocation3], 0
    %s9 = scalar_lea.sflag [#allocation3], 1
    %10 = vsyncpa %s9, 0
    loop: start=0, step=1, limit=10
    $region2: #{tpu_custom_call.1} parent=1 // loop_pre_header
      _
    $region3: #{tpu_custom_call.1} parent=1 // loop_header
      %s12 = sphi 0, %s16
      %p13 = scmp.ge.s32.totalorder %s12, 10
      %s22 = sphi 0, %s24
      %s25 = sphi 0, %s22
      %s26 = sphi 0, %s25
      %s42 = sphi 0, %s26
      %s46 = sphi 0, %s46
      %s48 = sphi 0, %s46
      %s49 = sphi 0, %s48
      %s63 = sphi 0, %s49
      %s67 = sphi 0, %s67
      %s69 = sphi 0, %s67
      %s70 = sphi 0, %s69
      %s84 = sphi 0, %s70
      %s90 = sphi 0, %s92
      %s93 = sphi 0, %s90
      %s94 = sphi 0, %s93
      %s110 = sphi 0, %s94
    $region4: #{tpu_custom_call.1} parent=1 // loop_header_branch
      %15 = sbr.rel (%p13) target = $region8
    $region5: #{tpu_custom_call.1} parent=1 // loop_body
      %s17 = ssub.s32 %s12, 1
      %s18 = ssub.s32 %s12, 2
      %s19 = sadd.s32 %s12, 1
      %s20 = ssub.s32 %s12, %s19
      %p21 = scmp.eq.s32.totalorder %s20, 0
      %s23 = sadd.s32 %s22, 1
      %s24 = scalar_select %p21, %s22, %s23
      %p27 = pneg %p21
      %p28 = scmp.eq.s32.totalorder %s12, 7
      %p29 = por %p27, %p28
      %p30 = scmp.ne.s32.totalorder %s22, %s25
      %p31 = scmp.eq.s32.totalorder %s12, 0
      %p32 = por %p30, %p31
      %p33 = scmp.ne.s32.totalorder %s22, %s25
      %p34 = scmp.eq.s32.totalorder %s17, 7
      %p35 = por %p33, %p34
      %p36 = scmp.ne.s32.totalorder %s25, %s26
      %p37 = scmp.eq.s32.totalorder %s17, 0
      %p38 = por %p36, %p37
      %p39 = scmp.ne.s32.totalorder %s25, %s26
      %p40 = scmp.eq.s32.totalorder %s18, 7
      %p41 = por %p39, %p40
      %p43 = scmp.ne.s32.totalorder %s26, %s42
      %p44 = scmp.eq.s32.totalorder %s18, 0
      %p45 = por %p43, %p44
      %s47 = sadd.s32 %s46, 1
      %p50 = scmp.eq.s32.totalorder %s12, 7
      %p51 = scmp.ne.s32.totalorder %s46, %s48
      %p52 = scmp.eq.s32.totalorder %s12, 0
      %p53 = por %p51, %p52
      %p54 = scmp.ne.s32.totalorder %s46, %s48
      %p55 = scmp.eq.s32.totalorder %s17, 7
      %p56 = por %p54, %p55
      %p57 = scmp.ne.s32.totalorder %s48, %s49
      %p58 = scmp.eq.s32.totalorder %s17, 0
      %p59 = por %p57, %p58
      %p60 = scmp.ne.s32.totalorder %s48, %s49
      %p61 = scmp.eq.s32.totalorder %s18, 7
      %p62 = por %p60, %p61
      %p64 = scmp.ne.s32.totalorder %s49, %s63
      %p65 = scmp.eq.s32.totalorder %s18, 0
      %p66 = por %p64, %p65
      %s68 = sadd.s32 %s67, 1
      %p71 = scmp.eq.s32.totalorder %s12, 7
      %p72 = scmp.ne.s32.totalorder %s67, %s69
      %p73 = scmp.eq.s32.totalorder %s12, 0
      %p74 = por %p72, %p73
      %p75 = scmp.ne.s32.totalorder %s67, %s69
      %p76 = scmp.eq.s32.totalorder %s17, 7
      %p77 = por %p75, %p76
      %p78 = scmp.ne.s32.totalorder %s69, %s70
      %p79 = scmp.eq.s32.totalorder %s17, 0
      %p80 = por %p78, %p79
      %p81 = scmp.ne.s32.totalorder %s69, %s70
      %p82 = scmp.eq.s32.totalorder %s18, 7
      %p83 = por %p81, %p82
      %p85 = scmp.ne.s32.totalorder %s70, %s84
      %p86 = scmp.eq.s32.totalorder %s18, 0
      %p87 = por %p85, %p86
      %s88 = ssub.s32 %s12, %s19
      %p89 = scmp.eq.s32.totalorder %s88, 0
      %s91 = sadd.s32 %s90, 1
      %s92 = scalar_select %p89, %s90, %s91
      %p95 = pneg %p89
      %p96 = scmp.eq.s32.totalorder %s12, 7
      %p97 = por %p95, %p96
      %p98 = scmp.ne.s32.totalorder %s90, %s93
      %p99 = scmp.eq.s32.totalorder %s12, 0
      %p100 = por %p98, %p99
      %p101 = scmp.ne.s32.totalorder %s90, %s93
      %p102 = scmp.eq.s32.totalorder %s17, 7
      %p103 = por %p101, %p102
      %p104 = scmp.ne.s32.totalorder %s93, %s94
      %p105 = scmp.eq.s32.totalorder %s17, 0
      %p106 = por %p104, %p105
      %p107 = scmp.ne.s32.totalorder %s93, %s94
      %p108 = scmp.eq.s32.totalorder %s18, 7
      %p109 = por %p107, %p108
      %p111 = scmp.ne.s32.totalorder %s94, %s110
      %p112 = scmp.eq.s32.totalorder %s18, 0
      %p113 = por %p111, %p112
      %p114 = scmp.le.s32.totalorder 1, %s12
      %p115 = scmp.lt.s32.totalorder %s12, 9
      %p116 = pnand %p114, %p115
      %p117 = pneg %p116
      // Predicated region
      $region9: #{tpu_custom_call.1} parent=5 // pred_check
        _
      $region10: #{tpu_custom_call.1} parent=5 // pred_check_branch
        %119 = sbr.rel (%p116) target = $region12
      $region11: #{tpu_custom_call.1} parent=5 // pred_region
        %s120 = ssub.s32 %s12, 1
        // Predicated region
        $region13: #{tpu_custom_call.1} parent=11 // pred_check
          %p121 = pneg %p59
        $region14: #{tpu_custom_call.1} parent=11 // pred_check_branch
          %123 = sbr.rel (%p121) target = $region16
        $region15: #{tpu_custom_call.1} parent=11 // pred_region
          _
        $region16: #{tpu_custom_call.1} parent=11 // pred_fallthru
          _
        // Predicated region
        $region17: #{tpu_custom_call.1} parent=11 // pred_check
          %p124 = pneg %p80
        $region18: #{tpu_custom_call.1} parent=11 // pred_check_branch
          %126 = sbr.rel (%p124) target = $region20
        $region19: #{tpu_custom_call.1} parent=11 // pred_region
          _
        $region20: #{tpu_custom_call.1} parent=11 // pred_fallthru
          _
      $region12: #{tpu_custom_call.1} parent=5 // pred_fallthru
        _
      %p127 = scmp.lt.s32.totalorder %s12, 8
      // Predicated region
      $region21: #{tpu_custom_call.1} parent=5 // pred_check
        %p128 = pneg %p127
      $region22: #{tpu_custom_call.1} parent=5 // pred_check_branch
        %130 = sbr.rel (%p128) target = $region24
      $region23: #{tpu_custom_call.1} parent=5 // pred_region
        // Predicated region
        $region25: #{tpu_custom_call.1} parent=23 // pred_check
          %p131 = pneg %p32
        $region26: #{tpu_custom_call.1} parent=23 // pred_check_branch
          %133 = sbr.rel (%p131) target = $region28
        $region27: #{tpu_custom_call.1} parent=23 // pred_region
          %p134 = scmp.lt.s32.totalorder %s12, 7
          %s135 = scalar_select %p134, %s12, 7
          %s136 = smul.addr %s135, 2
          %s137 = smul.addr %s136, 4
          %s138 = scalar_lea.vmem %s0, %s137
        $region28: #{tpu_custom_call.1} parent=23 // pred_fallthru
          _
      $region24: #{tpu_custom_call.1} parent=5 // pred_fallthru
        _
      %p139 = scmp.le.s32.totalorder 1, %s12
      %p140 = scmp.lt.s32.totalorder %s12, 9
      %p141 = pnand %p139, %p140
      %p142 = pneg %p141
      // Predicated region
      $region29: #{tpu_custom_call.1} parent=5 // pred_check
        _
      $region30: #{tpu_custom_call.1} parent=5 // pred_check_branch
        %144 = sbr.rel (%p141) target = $region32
      $region31: #{tpu_custom_call.1} parent=5 // pred_region
        %s145 = ssub.s32 %s12, 1
        %p146 = scmp.lt.s32.totalorder %s17, 7
        %s147 = scalar_select %p146, %s17, 7
        %s148 = smul.addr %s147, 2
        %s149 = smul.addr %s148, 4
        %s150 = scalar_lea.vmem %s0, %s149
        %p151 = pneg %p38
        %p152 = pneg %p35
        %p153 = pneg %p59
        %p154 = pneg %p56
        %p155 = pneg %p80
        %p156 = pneg %p77
        %p157 = pneg %p106
        %p158 = pneg %p103
        %s159 = sand.u32 %s93, 1
        %s160 = scalar_lea.sflag [#allocation3], %s159
        %s161 = sand.u32 %s93, 1
        %s162 = smul.addr %s161, 2
        %s163 = scalar_lea.vmem [#allocation2], %s162
        %p164 = scmp.lt.s32.totalorder %s17, 7
        %s165 = scalar_select %p164, %s17, 7
        %s166 = smul.addr %s165, 2
        %s167 = smul.addr %s166, 4
        %s168 = scalar_lea.vmem %s0, %s167
        %v170 = vld [vmem:[%s2] sm:$0x1]
        %v172 = vlaneseq
        %v173 = vshrl.u32 %v172, 7
        %v174 = vsub.s32 0, %v173
        %v175 = vrot.slane %v170, %v174
        %v177 = vadd.f32 %v175, 0.0
        %v178 = vld [vmem:[%s168] sm:$0xf]
        %v179 = vpack.c.bf16 %v178, %v178
        %v180 = vld [vmem:[%s1] sm:$0xf]
        %v181 = vld [vmem:[%s1 + $0x4] sm:$0xf]
        %v182 = vld [vmem:[%s1 + $0x8] sm:$0xf]
        %v183 = vld [vmem:[%s1 + $0xc] sm:$0xf]
        %v184 = vld [vmem:[%s1 + $0x10] sm:$0xf]
        %v185 = vld [vmem:[%s1 + $0x14] sm:$0xf]
        %v186 = vld [vmem:[%s1 + $0x18] sm:$0xf]
        %v187 = vld [vmem:[%s1 + $0x1c] sm:$0xf]
        %v196 = vunpack.c.l.b16 %v180
        %v197 = vunpack.c.l.b16 %v181
        %v198 = vunpack.c.l.b16 %v182
        %v199 = vunpack.c.l.b16 %v183
        %v200 = vunpack.c.l.b16 %v184
        %v201 = vunpack.c.l.b16 %v185
        %v202 = vunpack.c.l.b16 %v186
        %v203 = vunpack.c.l.b16 %v187
        %v204 = vpack.c.b16 %v197, %v196
        %v205 = vpack.c.b16 %v199, %v198
        %v206 = vpack.c.b16 %v201, %v200
        %v207 = vpack.c.b16 %v203, %v202
        %vm212 = vcmask 523264
        %v214 = vsel %vm212, %v179, 0
        %216 = vmatprep.subr.bf16.mxu0 0
        %217 = vmatpush1.bf16.msra.mxu0 %v204
        %218 = vmatprep.subr.bf16.mxu0 0
        %219 = vmatpush1.bf16.msra.mxu0 %v205
        %220 = vmatprep.subr.bf16.mxu0 0
        %221 = vmatpush1.bf16.msra.mxu0 %v206
        %222 = vmatprep.subr.bf16.mxu0 0
        %223 = vmatpush1.bf16.msra.mxu0 %v207
        %224 = vmatprep.subr.bf16.mxu0 0
        %225 = vmatpush1.bf16.msra.mxu0 0
        %226 = vmatprep.subr.bf16.mxu0 0
        %227 = vmatpush1.bf16.msra.mxu0 0
        %228 = vmatprep.subr.bf16.mxu0 0
        %229 = vmatpush1.bf16.msra.mxu0 0
        %230 = vmatprep.subr.bf16.mxu0 0
        %231 = vmatpush1.bf16.msra.mxu0 0
        %232 = vmatprep.subr.bf16.mxu0 0
        %233 = vmatpush1.bf16.msra.mxu0 0
        %234 = vmatprep.subr.bf16.mxu0 0
        %235 = vmatpush1.bf16.msra.mxu0 0
        %236 = vmatprep.subr.bf16.mxu0 0
        %237 = vmatpush1.bf16.msra.mxu0 0
        %238 = vmatprep.subr.bf16.mxu0 0
        %239 = vmatpush1.bf16.msra.mxu0 0
        %240 = vmatprep.subr.bf16.mxu0 0
        %241 = vmatpush1.bf16.msra.mxu0 0
        %242 = vmatprep.subr.bf16.mxu0 0
        %243 = vmatpush1.bf16.msra.mxu0 0
        %244 = vmatprep.subr.bf16.mxu0 0
        %245 = vmatpush1.bf16.msra.mxu0 0
        %246 = vmatprep.subr.bf16.mxu0 0
        %247 = vmatpush1.bf16.msra.mxu0 0
        %248 = vmatprep.mubr.bf16.mxu0 0
        %249 = vmatmul.mubr.bf16.gmra.mrb[0].mxu0 %v214
        %v250 = vpop.f32.mrb[0].mxu0
        %v251 = vadd.f32 0.0, %v250
        %v252 = vpop.f32.mrb[0].mxu0
        %v253 = vpop.f32.mrb[0].mxu0
        %v254 = vpop.f32.mrb[0].mxu0
        %255 = vdwg.mxu0
        %v256 = vadd.f32 %v177, %v251
        %s257 = scalar_lea.vmem %s168, 4
        %v258 = vld [vmem:[%s257] sm:$0xf]
        %v259 = vpack.c.bf16 %v258, %v258
        %s260 = scalar_lea.vmem %s1, 32
        %v261 = vld [vmem:[%s260] sm:$0xf]
        %v262 = vld [vmem:[%s260 + $0x4] sm:$0xf]
        %v263 = vld [vmem:[%s260 + $0x8] sm:$0xf]
        %v264 = vld [vmem:[%s260 + $0xc] sm:$0xf]
        %v265 = vld [vmem:[%s260 + $0x10] sm:$0xf]
        %v266 = vld [vmem:[%s260 + $0x14] sm:$0xf]
        %v267 = vld [vmem:[%s260 + $0x18] sm:$0xf]
        %v268 = vld [vmem:[%s260 + $0x1c] sm:$0xf]
        %v277 = vunpack.c.l.b16 %v261
        %v278 = vunpack.c.l.b16 %v262
        %v279 = vunpack.c.l.b16 %v263
        %v280 = vunpack.c.l.b16 %v264
        %v281 = vunpack.c.l.b16 %v265
        %v282 = vunpack.c.l.b16 %v266
        %v283 = vunpack.c.l.b16 %v267
        %v284 = vunpack.c.l.b16 %v268
        %v285 = vpack.c.b16 %v278, %v277
        %v286 = vpack.c.b16 %v280, %v279
        %v287 = vpack.c.b16 %v282, %v281
        %v288 = vpack.c.b16 %v284, %v283
        %v294 = vsel %vm212, %v259, 0
        %296 = vmatprep.subr.bf16.mxu0 0
        %297 = vmatpush1.bf16.msra.mxu0 %v285
        %298 = vmatprep.subr.bf16.mxu0 0
        %299 = vmatpush1.bf16.msra.mxu0 %v286
        %300 = vmatprep.subr.bf16.mxu0 0
        %301 = vmatpush1.bf16.msra.mxu0 %v287
        %302 = vmatprep.subr.bf16.mxu0 0
        %303 = vmatpush1.bf16.msra.mxu0 %v288
        %304 = vmatprep.subr.bf16.mxu0 0
        %305 = vmatpush1.bf16.msra.mxu0 0
        %306 = vmatprep.subr.bf16.mxu0 0
        %307 = vmatpush1.bf16.msra.mxu0 0
        %308 = vmatprep.subr.bf16.mxu0 0
        %309 = vmatpush1.bf16.msra.mxu0 0
        %310 = vmatprep.subr.bf16.mxu0 0
        %311 = vmatpush1.bf16.msra.mxu0 0
        %312 = vmatprep.subr.bf16.mxu0 0
        %313 = vmatpush1.bf16.msra.mxu0 0
        %314 = vmatprep.subr.bf16.mxu0 0
        %315 = vmatpush1.bf16.msra.mxu0 0
        %316 = vmatprep.subr.bf16.mxu0 0
        %317 = vmatpush1.bf16.msra.mxu0 0
        %318 = vmatprep.subr.bf16.mxu0 0
        %319 = vmatpush1.bf16.msra.mxu0 0
        %320 = vmatprep.subr.bf16.mxu0 0
        %321 = vmatpush1.bf16.msra.mxu0 0
        %322 = vmatprep.subr.bf16.mxu0 0
        %323 = vmatpush1.bf16.msra.mxu0 0
        %324 = vmatprep.subr.bf16.mxu0 0
        %325 = vmatpush1.bf16.msra.mxu0 0
        %326 = vmatprep.subr.bf16.mxu0 0
        %327 = vmatpush1.bf16.msra.mxu0 0
        %328 = vmatprep.mubr.bf16.mxu0 0
        %329 = vmatmul.mubr.bf16.gmra.mrb[0].mxu0 %v294
        %v330 = vpop.f32.mrb[0].mxu0
        %v331 = vadd.f32 0.0, %v330
        %v332 = vpop.f32.mrb[0].mxu0
        %v333 = vpop.f32.mrb[0].mxu0
        %v334 = vpop.f32.mrb[0].mxu0
        %335 = vdwg.mxu0
        %v336 = vadd.f32 %v256, %v331
        %v337 = vpack.c.bf16 %v336, %v336
        %vm338 = vcmask 254976
        %339 = vst.msk [vmem:[%s163] sm:$0x3] %vm338, %v337
        %s340 = sand.u32 %s93, 1
        %s341 = scalar_lea.sflag [#allocation3], %s340
        %s342 = sand.u32 %s93, 1
        %s343 = smul.addr %s342, 2
        %s344 = scalar_lea.vmem [#allocation2], %s343
        // Predicated region
        $region33: #{tpu_custom_call.1} parent=31 // pred_check
          %p345 = pneg %p103
        $region34: #{tpu_custom_call.1} parent=31 // pred_check_branch
          %347 = sbr.rel (%p345) target = $region36
        $region35: #{tpu_custom_call.1} parent=31 // pred_region
          %s349 = ssub.s32 32, 32
          %350 = vsyncadd %s341, %s349
          %s351 = smul.addr %s17, 32
          %s352 = scalar_lea.hbm %s3, %s351
          %s354 = sshll.u32 %s344, 4
          %s355 = int_to_ptr.vmem [resolvable:$true] %s354
          %357 = dma.vmem_to_hbm [thread:$0]  %s355, 32, %s352, %s341
        $region36: #{tpu_custom_call.1} parent=31 // pred_fallthru
          _
      $region32: #{tpu_custom_call.1} parent=5 // pred_fallthru
        _
      %p358 = scmp.le.s32.totalorder 2, %s12
      // Predicated region
      $region37: #{tpu_custom_call.1} parent=5 // pred_check
        %p359 = pneg %p358
      $region38: #{tpu_custom_call.1} parent=5 // pred_check_branch
        %361 = sbr.rel (%p359) target = $region40
      $region39: #{tpu_custom_call.1} parent=5 // pred_region
        %s362 = ssub.s32 %s12, 2
        // Predicated region
        $region41: #{tpu_custom_call.1} parent=39 // pred_check
          %p363 = pneg %p109
        $region42: #{tpu_custom_call.1} parent=39 // pred_check_branch
          %365 = sbr.rel (%p363) target = $region44
        $region43: #{tpu_custom_call.1} parent=39 // pred_region
          %s366 = sand.u32 %s94, 1
          %s367 = scalar_lea.sflag [#allocation3], %s366
          %s368 = sand.u32 %s94, 1
          %s369 = smul.addr %s368, 2
          %s370 = scalar_lea.vmem [#allocation2], %s369
          %371 = dma.done %s367, 32
        $region44: #{tpu_custom_call.1} parent=39 // pred_fallthru
          _
      $region40: #{tpu_custom_call.1} parent=5 // pred_fallthru
        _
    $region6: #{tpu_custom_call.1} parent=1 // loop_footer
      %s16 = sadd.s32 1, %s12
    $region7: #{tpu_custom_call.1} parent=1 // loop_footer_branch
      %11 = sbr.rel target = $region3
    $region8: #{tpu_custom_call.1} parent=1 // loop_exit
      _
    %372 = vsyncpa [#allocation3], 1
    %s373 = scalar_lea.sflag [#allocation3], 1
    %374 = vsyncpa %s373, 1

</llo_original>
